<compile_context>
chip_gen: v5e
topology: v5e:2x2
jax: 0.10.0
libtpu: 0.0.40
codegen_flags: <defaults>
</compile_context>

<pallas_src>
import jax
import jax.numpy as jnp
from jax.experimental import pallas as pl
from jax.experimental.pallas import tpu as pltpu

OUT_LANES = 128  # lane-dense output slab width; only column 0 is meaningful


def discriminator_kernel(z_ref, w1_ref, b1_ref, w2_ref, b2_ref, w3_ref, b3_ref, o_ref):
    # Hoist bias broadcasts once per tile.
    b1 = b1_ref[...]
    b2 = b2_ref[...]
    b3 = b3_ref[...]

    # Layer 1: Linear(z_dim, 512) + ReLU  (bf16 inputs, f32 accumulation)
    z = z_ref[...].astype(jnp.bfloat16)
    h1 = jnp.dot(z, w1_ref[...], preferred_element_type=jnp.float32)
    h1 = jnp.maximum(h1 + b1, 0.0)

    # Layer 2: Linear(512, 512) + ReLU  (the MXU-dominant layer)
    h2 = jnp.dot(h1.astype(jnp.bfloat16), w2_ref[...],
                 preferred_element_type=jnp.float32)
    h2 = jnp.maximum(h2 + b2, 0.0)

    # Layer 3: Linear(512, 1) + Sigmoid
    logits = jnp.dot(h2.astype(jnp.bfloat16), w3_ref[...],
                     preferred_element_type=jnp.float32) + b3
    probs = jax.nn.sigmoid(logits)                      # (TM, 1)

    # Lane-dense store: broadcast across 128 lanes; wrapper keeps column 0.
    o_ref[...] = jnp.broadcast_to(probs, o_ref.shape)


def discriminator_forward(z, params, tm=1024):
    """z: (B, z_dim) float32 -> (B, 1) float32."""
    w1, b1, w2, b2, w3, b3 = params
    B, z_dim = z.shape
    H1 = w1.shape[1]
    H2 = w2.shape[1]

    # bf16 weights (MXU-native on v5e/v6e/v7x); biases stay f32 (added to f32 acc).
    w1b = w1.astype(jnp.bfloat16)
    w2b = w2.astype(jnp.bfloat16)
    w3b = w3.astype(jnp.bfloat16)

    # Tile size: multiple of 8 sublanes, capped at `tm`, capped by (rounded) batch.
    tm = int(min(tm, max(8, ((B + 7) // 8) * 8)))
    num_tiles = pl.cdiv(B, tm)
    b_pad = num_tiles * tm
    if b_pad != B:
        z = jnp.pad(z, ((0, b_pad - B), (0, 0)))

    out = pl.pallas_call(
        discriminator_kernel,
        out_shape=jax.ShapeDtypeStruct((b_pad, OUT_LANES), jnp.float32),
        grid=(num_tiles,),
        in_specs=[
            pl.BlockSpec((tm, z_dim), lambda i: (i, 0)),     # z: tiled over batch
            pl.BlockSpec((z_dim, H1), lambda i: (0, 0)),     # w1: resident
            pl.BlockSpec((1, H1), lambda i: (0, 0)),         # b1: resident
            pl.BlockSpec((H1, H2), lambda i: (0, 0)),        # w2: resident
            pl.BlockSpec((1, H2), lambda i: (0, 0)),         # b2: resident
            pl.BlockSpec((H2, 1), lambda i: (0, 0)),         # w3: resident
            pl.BlockSpec((1, 1), lambda i: (0, 0)),          # b3: resident
        ],
        out_specs=pl.BlockSpec((tm, OUT_LANES), lambda i: (i, 0)),
        compiler_params=pltpu.CompilerParams(
            dimension_semantics=("parallel",),               # v7x: 2 TCs share the batch axis
        ),
    )(z, w1b, b1, w2b, b2, w3b, b3)

    return out[:B, :1]


def init_params(key, z_dim=10):
    """Kaiming-normal init matching kaiming_init in the PyTorch reference.

    PyTorch kaiming_normal_ (fan_in, gain=sqrt(2)): std = sqrt(2 / fan_in).
    Biases are zero-filled. Weights stored as (in, out) for the kernel layout.
    """
    k1, k2, k3 = jax.random.split(key, 3)

    def kaiming(k, fan_in, fan_out):
        std = jnp.sqrt(2.0 / fan_in)
        return jax.random.normal(k, (fan_in, fan_out), jnp.float32) * std

    w1 = kaiming(k1, z_dim, 512)
    b1 = jnp.zeros((1, 512), jnp.float32)
    w2 = kaiming(k2, 512, 512)
    b2 = jnp.zeros((1, 512), jnp.float32)
    w3 = kaiming(k3, 512, 1)
    b3 = jnp.zeros((1, 1), jnp.float32)
    return (w1, b1, w2, b2, w3, b3)


def reference_forward(z, params):
    """Pure-JAX f32 reference for correctness checking."""
    w1, b1, w2, b2, w3, b3 = params
    h1 = jnp.maximum(z @ w1 + b1, 0.0)
    h2 = jnp.maximum(h1 @ w2 + b2, 0.0)
    return jax.nn.sigmoid(h2 @ w3 + b3)


if __name__ == "__main__":
    key = jax.random.PRNGKey(0)
    pkey, zkey1, zkey2 = jax.random.split(key, 3)

    z_dim = 10
    params = init_params(pkey, z_dim=z_dim)

    # Small shape implied by the module (batch of latent codes).
    batch = 8
    z = jax.random.normal(zkey1, (batch, z_dim), jnp.float32)
    out = jax.block_until_ready(discriminator_forward(z, params))
    ref = reference_forward(z, params)
    assert out.shape == (batch, 1), out.shape
    # bf16 matmul inputs with f32 accumulation -> relaxed tolerance vs f32 ref.
    assert jnp.allclose(out, ref, atol=2e-2, rtol=0.0), "mismatch vs reference (B=8)"

    # Exercise the batch grid + padding path (B not a multiple of TM, multi-tile).
    batch2 = 300
    z2 = jax.random.normal(zkey2, (batch2, z_dim), jnp.float32)
    out2 = jax.block_until_ready(discriminator_forward(z2, params, tm=128))
    ref2 = reference_forward(z2, params)
    assert out2.shape == (batch2, 1), out2.shape
    assert jnp.allclose(out2, ref2, atol=2e-2, rtol=0.0), "mismatch vs reference (B=300)"

    print("KERNEL_OK")
</pallas_src>

<mosaic_0001>
module attributes {stable_mosaic.version = 11 : i64} {
  func.func @discriminator_kernel(%arg0: i32, %arg1: memref<8x10xf32, #tpu.memory_space<vmem>>, %arg2: memref<10x512xbf16, #tpu.memory_space<vmem>>, %arg3: memref<1x512xf32, #tpu.memory_space<vmem>>, %arg4: memref<512x512xbf16, #tpu.memory_space<vmem>>, %arg5: memref<1x512xf32, #tpu.memory_space<vmem>>, %arg6: memref<512x1xbf16, #tpu.memory_space<vmem>>, %arg7: memref<1x1xf32, #tpu.memory_space<vmem>>, %arg8: memref<8x128xf32, #tpu.memory_space<vmem>>) attributes {dimension_semantics = [#tpu.dimension_semantics<parallel>], iteration_bounds = array<i64: 1>, scalar_prefetch = 0 : i64, scratch_operands = 0 : i64, tpu.core_type = #tpu.core_type<tc>, window_params = [{transform_indices = @transform_0, window_bounds = array<i64: 8, 10>}, {pipeline_mode = #tpu.pipeline_mode<synchronous>, transform_indices = @transform_1, window_bounds = array<i64: 10, 512>}, {pipeline_mode = #tpu.pipeline_mode<synchronous>, transform_indices = @transform_2, window_bounds = array<i64: 1, 512>}, {pipeline_mode = #tpu.pipeline_mode<synchronous>, transform_indices = @transform_3, window_bounds = array<i64: 512, 512>}, {pipeline_mode = #tpu.pipeline_mode<synchronous>, transform_indices = @transform_4, window_bounds = array<i64: 1, 512>}, {pipeline_mode = #tpu.pipeline_mode<synchronous>, transform_indices = @transform_5, window_bounds = array<i64: 512, 1>}, {pipeline_mode = #tpu.pipeline_mode<synchronous>, transform_indices = @transform_6, window_bounds = array<i64: 1, 1>}, {transform_indices = @transform_7, window_bounds = array<i64: 8, 128>}]} {
    %c0 = arith.constant 0 : index
    %c0_0 = arith.constant 0 : index
    %0 = vector.load %arg3[%c0, %c0_0] : memref<1x512xf32, #tpu.memory_space<vmem>>, vector<1x512xf32>
    %c0_1 = arith.constant 0 : index
    %c0_2 = arith.constant 0 : index
    %1 = vector.load %arg5[%c0_1, %c0_2] : memref<1x512xf32, #tpu.memory_space<vmem>>, vector<1x512xf32>
    %c0_3 = arith.constant 0 : index
    %c0_4 = arith.constant 0 : index
    %2 = vector.load %arg7[%c0_3, %c0_4] : memref<1x1xf32, #tpu.memory_space<vmem>>, vector<1x1xf32>
    %c0_5 = arith.constant 0 : index
    %c0_6 = arith.constant 0 : index
    %3 = vector.load %arg1[%c0_5, %c0_6] : memref<8x10xf32, #tpu.memory_space<vmem>>, vector<8x10xf32>
    %4 = arith.truncf %3 : vector<8x10xf32> to vector<8x10xbf16>
    %c0_7 = arith.constant 0 : index
    %c0_8 = arith.constant 0 : index
    %5 = vector.load %arg2[%c0_7, %c0_8] : memref<10x512xbf16, #tpu.memory_space<vmem>>, vector<10x512xbf16>
    %cst = arith.constant dense<0.000000e+00> : vector<8x512xf32>
    %6 = tpu.matmul %4, %5, %cst {dimension_numbers = #tpu.dot_dimension_numbers<[1], [0], [0], [1], [0, 0, 1, 1], [], []>} : vector<8x10xbf16>, vector<10x512xbf16>, vector<8x512xf32> -> vector<8x512xf32>
    %7 = vector.broadcast %0 : vector<1x512xf32> to vector<8x512xf32>
    %8 = arith.addf %6, %7 : vector<8x512xf32>
    %cst_9 = arith.constant 0.000000e+00 : f32
    %9 = vector.broadcast %cst_9 : f32 to vector<8x512xf32>
    %10 = arith.maximumf %8, %9 : vector<8x512xf32>
    %11 = arith.truncf %10 : vector<8x512xf32> to vector<8x512xbf16>
    %c0_10 = arith.constant 0 : index
    %c0_11 = arith.constant 0 : index
    %12 = vector.load %arg4[%c0_10, %c0_11] : memref<512x512xbf16, #tpu.memory_space<vmem>>, vector<512x512xbf16>
    %cst_12 = arith.constant dense<0.000000e+00> : vector<8x512xf32>
    %13 = tpu.matmul %11, %12, %cst_12 {dimension_numbers = #tpu.dot_dimension_numbers<[1], [0], [0], [1], [0, 0, 1, 1], [], []>} : vector<8x512xbf16>, vector<512x512xbf16>, vector<8x512xf32> -> vector<8x512xf32>
    %14 = vector.broadcast %1 : vector<1x512xf32> to vector<8x512xf32>
    %15 = arith.addf %13, %14 : vector<8x512xf32>
    %cst_13 = arith.constant 0.000000e+00 : f32
    %16 = vector.broadcast %cst_13 : f32 to vector<8x512xf32>
    %17 = arith.maximumf %15, %16 : vector<8x512xf32>
    %18 = arith.truncf %17 : vector<8x512xf32> to vector<8x512xbf16>
    %c0_14 = arith.constant 0 : index
    %c0_15 = arith.constant 0 : index
    %19 = vector.load %arg6[%c0_14, %c0_15] : memref<512x1xbf16, #tpu.memory_space<vmem>>, vector<512x1xbf16>
    %cst_16 = arith.constant dense<0.000000e+00> : vector<8x1xf32>
    %20 = tpu.matmul %18, %19, %cst_16 {dimension_numbers = #tpu.dot_dimension_numbers<[1], [0], [0], [1], [0, 0, 1, 1], [], []>} : vector<8x512xbf16>, vector<512x1xbf16>, vector<8x1xf32> -> vector<8x1xf32>
    %21 = vector.broadcast %2 : vector<1x1xf32> to vector<8x1xf32>
    %22 = arith.addf %20, %21 : vector<8x1xf32>
    %23 = arith.negf %22 : vector<8x1xf32>
    %24 = math.exp %23 : vector<8x1xf32>
    %cst_17 = arith.constant 1.000000e+00 : f32
    %25 = vector.broadcast %cst_17 : f32 to vector<8x1xf32>
    %26 = arith.addf %25, %24 : vector<8x1xf32>
    %27 = arith.divf %25, %26 : vector<8x1xf32>
    %28 = vector.shape_cast %27 : vector<8x1xf32> to vector<8x1xf32>
    %29 = vector.broadcast %28 : vector<8x1xf32> to vector<8x128xf32>
    %c0_18 = arith.constant 0 : index
    %c0_19 = arith.constant 0 : index
    %30 = vector.load %arg8[%c0_18, %c0_19] : memref<8x128xf32, #tpu.memory_space<vmem>>, vector<8x128xf32>
    tpu.vector_store %arg8[%c0_18, %c0_19], %29 {strides = array<i32>} : memref<8x128xf32, #tpu.memory_space<vmem>>, vector<8x128xf32>,
    return
  }
  func.func @transform_0(%arg0: i32) -> (i32, i32) {
    %c0_i32 = arith.constant 0 : i32
    %c0_i32_0 = arith.constant 0 : i32
    return %arg0, %c0_i32 : i32, i32
  }
  func.func @transform_1(%arg0: i32) -> (i32, i32) {
    %c0_i32 = arith.constant 0 : i32
    %c0_i32_0 = arith.constant 0 : i32
    %c0_i32_1 = arith.constant 0 : i32
    return %c0_i32, %c0_i32_0 : i32, i32
  }
  func.func @transform_2(%arg0: i32) -> (i32, i32) {
    %c0_i32 = arith.constant 0 : i32
    %c0_i32_0 = arith.constant 0 : i32
    %c0_i32_1 = arith.constant 0 : i32
    return %c0_i32, %c0_i32_0 : i32, i32
  }
  func.func @transform_3(%arg0: i32) -> (i32, i32) {
    %c0_i32 = arith.constant 0 : i32
    %c0_i32_0 = arith.constant 0 : i32
    %c0_i32_1 = arith.constant 0 : i32
    return %c0_i32, %c0_i32_0 : i32, i32
  }
  func.func @transform_4(%arg0: i32) -> (i32, i32) {
    %c0_i32 = arith.constant 0 : i32
    %c0_i32_0 = arith.constant 0 : i32
    %c0_i32_1 = arith.constant 0 : i32
    return %c0_i32, %c0_i32_0 : i32, i32
  }
  func.func @transform_5(%arg0: i32) -> (i32, i32) {
    %c0_i32 = arith.constant 0 : i32
    %c0_i32_0 = arith.constant 0 : i32
    %c0_i32_1 = arith.constant 0 : i32
    return %c0_i32, %c0_i32_0 : i32, i32
  }
  func.func @transform_6(%arg0: i32) -> (i32, i32) {
    %c0_i32 = arith.constant 0 : i32
    %c0_i32_0 = arith.constant 0 : i32
    %c0_i32_1 = arith.constant 0 : i32
    return %c0_i32, %c0_i32_0 : i32, i32
  }
  func.func @transform_7(%arg0: i32) -> (i32, i32) {
    %c0_i32 = arith.constant 0 : i32
    %c0_i32_0 = arith.constant 0 : i32
    return %arg0, %c0_i32 : i32, i32
  }
}

</mosaic_0001>

<llo_original>
// kernel: tpu_custom_call.1
$region0: #{tpu_custom_call.1}
  #allocation0 [shape = 'u32[]', space=smem, size = 0x4, offset = 0x4, fixed_abs, tag = 'smem constant byte address 0x4 - core index']
  #allocation1 [shape = 'u32[72,128]{1,0:T(1,128)}', space=vmem, size = 0x9000, scoped, tag = 'internal scratch']
  #allocation2 [shape = 'f32[1,1]{1,0:T(1,128)S(1)}', space=vmem, size = 0x200, scoped, tag = 'scoped memory for tpu_custom_call.1']
  %s0 = inlined_call_operand.vmem [shape: f32[8,10], index: 0, kind: input, shape index: {}]
  %s1 = inlined_call_operand.vmem [shape: bf16[10,512], index: 1, kind: input, shape index: {}]
  %s2 = inlined_call_operand.vmem [shape: f32[1,512], index: 2, kind: input, shape index: {}]
  %s3 = inlined_call_operand.hbm [shape: bf16[512,512], index: 3, kind: input, shape index: {}]
  %s4 = inlined_call_operand.vmem [shape: f32[1,512], index: 4, kind: input, shape index: {}]
  %s5 = inlined_call_operand.vmem [shape: bf16[512,1], index: 5, kind: input, shape index: {}]
  %s6 = inlined_call_operand.<no memory space> [shape: f32[1,1], index: 6, kind: input, shape index: {}]
  %s7 = inlined_call_operand.hbm [shape: f32[8,128], index: 7, kind: output, shape index: {}]
  %s8 = sld [smem:[#allocation0]]
  $region42: #{tpu_custom_call.1} parent=0
    _
  %s10 = ssub.s32 1, %s8
  %s11 = scalar_select 0, %s10, %s8
  %v12 = vstv %s6
  %13 = vst [vmem:[#allocation2] sm:$0x1] %v12
  $region1: #{tpu_custom_call.1} parent=0
    #allocation3 [shape = 'u8[524288]{0}', space=vmem, size = 0x80000, scoped, tag = 'input window, operand 3, single buffered']
    #allocation4 [shape = 's32[1]{0}', space=sflag, size = 0x4, scoped, tag = 'scoped memory for tpu_custom_call.1']
    #allocation5 [shape = 's32[1]{0}', space=sflag, size = 0x4, scoped, tag = 'scoped memory for tpu_custom_call.1']
    #allocation6 [shape = 'u8[4096]{0}', space=vmem, size = 0x1000, scoped, tag = 'output window, operand 0, single buffered']
    %14 = vsyncpa [#allocation4], 0
    %15 = vsyncpa [#allocation5], 0
    // Predicated region
    $region2: #{tpu_custom_call.1} parent=1 // pred_check
      _
    $region3: #{tpu_custom_call.1} parent=1 // pred_check_branch
      %17 = sbr.rel (0) target = $region5
    $region4: #{tpu_custom_call.1} parent=1 // pred_region
      _
    $region5: #{tpu_custom_call.1} parent=1 // pred_fallthru
      _
    // Predicated region
    $region6: #{tpu_custom_call.1} parent=1 // pred_check
      _
    $region7: #{tpu_custom_call.1} parent=1 // pred_check_branch
      %19 = sbr.rel (0) target = $region9
    $region8: #{tpu_custom_call.1} parent=1 // pred_region
      _
    $region9: #{tpu_custom_call.1} parent=1 // pred_fallthru
      _
    // Predicated region
    $region10: #{tpu_custom_call.1} parent=1 // pred_check
      _
    $region11: #{tpu_custom_call.1} parent=1 // pred_check_branch
      %21 = sbr.rel (0) target = $region13
    $region12: #{tpu_custom_call.1} parent=1 // pred_region
      _
    $region13: #{tpu_custom_call.1} parent=1 // pred_fallthru
      _
    // Predicated region
    $region14: #{tpu_custom_call.1} parent=1 // pred_check
      _
    $region15: #{tpu_custom_call.1} parent=1 // pred_check_branch
      %23 = sbr.rel (0) target = $region17
    $region16: #{tpu_custom_call.1} parent=1 // pred_region
      %25 = vsyncadd [#allocation4], 0
      %s26 = sshll.u32 %s3, 4
      %s27 = int_to_ptr.hbm [resolvable:$true] %s26
      %s28 = sshll.u32 [#allocation3], 4
      %s29 = int_to_ptr.vmem [resolvable:$true] %s28
      %34 = dma.hbm_to_vmem [thread:$0]  %s27, 16384, %s29, [#allocation4], 256, 256, 16
    $region17: #{tpu_custom_call.1} parent=1 // pred_fallthru
      _
    // Predicated region
    $region18: #{tpu_custom_call.1} parent=1 // pred_check
      _
    $region19: #{tpu_custom_call.1} parent=1 // pred_check_branch
      %36 = sbr.rel (0) target = $region21
    $region20: #{tpu_custom_call.1} parent=1 // pred_region
      _
    $region21: #{tpu_custom_call.1} parent=1 // pred_fallthru
      _
    // Predicated region
    $region22: #{tpu_custom_call.1} parent=1 // pred_check
      _
    $region23: #{tpu_custom_call.1} parent=1 // pred_check_branch
      %38 = sbr.rel (0) target = $region25
    $region24: #{tpu_custom_call.1} parent=1 // pred_region
      _
    $region25: #{tpu_custom_call.1} parent=1 // pred_fallthru
      _
    // Predicated region
    $region26: #{tpu_custom_call.1} parent=1 // pred_check
      _
    $region27: #{tpu_custom_call.1} parent=1 // pred_check_branch
      %40 = sbr.rel (0) target = $region29
    $region28: #{tpu_custom_call.1} parent=1 // pred_region
      _
    $region29: #{tpu_custom_call.1} parent=1 // pred_fallthru
      _
    // Predicated region
    $region30: #{tpu_custom_call.1} parent=1 // pred_check
      _
    $region31: #{tpu_custom_call.1} parent=1 // pred_check_branch
      %42 = sbr.rel (0) target = $region33
    $region32: #{tpu_custom_call.1} parent=1 // pred_region
      %44 = dma.done [#allocation4], 16384
    $region33: #{tpu_custom_call.1} parent=1 // pred_fallthru
      _
    %v46 = vld [vmem:[%s2] sm:$0xf]
    %v47 = vld [vmem:[%s4] sm:$0xf]
    %v48 = vld [vmem:[#allocation2] sm:$0x1]
    %v49 = vld [vmem:[%s0] sm:$0xff]
    %v50 = vpack.c.bf16 %v49, %v49
    %v51 = vld [vmem:[%s1] sm:$0xff]
    %v52 = vld [vmem:[%s1 + $0x8] sm:$0xff]
    %v53 = vld [vmem:[%s1 + $0x10] sm:$0x11]
    %v54 = vld [vmem:[%s1 + $0x18] sm:$0x11]
    %v56 = vperm.slane %v46, 0
    %v57 = vperm.slane %v46, 1
    %v58 = vperm.slane %v46, 2
    %v59 = vperm.slane %v46, 3
    %v68 = vunpack.c.l.b16 %v51
    %v69 = vunpack.c.h.b16 %v51
    %v70 = vunpack.c.l.b16 %v52
    %v71 = vunpack.c.h.b16 %v52
    %v72 = vunpack.c.l.b16 %v53
    %v73 = vunpack.c.h.b16 %v53
    %v74 = vunpack.c.l.b16 %v54
    %v75 = vunpack.c.h.b16 %v54
    %v76 = vpack.c.b16 %v72, %v68
    %v77 = vpack.c.b16 %v73, %v69
    %v78 = vpack.c.b16 %v74, %v70
    %v79 = vpack.c.b16 %v75, %v71
    %vm80 = vcmask 80896
    %v82 = vsel %vm80, %v50, 0
    %vm84 = vcmask 1044480
    %v86 = vsel %vm84, %v76, 0
    %v89 = vsel %vm84, %v77, 0
    %v92 = vsel %vm84, %v78, 0
    %v95 = vsel %vm84, %v79, 0
    %97 = vmatpush.bf16.msra.mxu0 0
    %98 = vmatpush.bf16.msra.mxu0 0
    %99 = vmatpush.bf16.msra.mxu0 0
    %100 = vmatpush.bf16.msra.mxu0 0
    %101 = vmatpush.bf16.msra.mxu0 0
    %102 = vmatpush.bf16.msra.mxu0 0
    %103 = vmatpush.bf16.msra.mxu0 0
    %104 = vmatpush.bf16.msra.mxu0 %v86
    %105 = vmatmul.bf16.gmra.mxu0 %v82
    %v106 = vpop.f32.mrf.mxu0
    %v107 = vadd.f32 %v56, %v106
    %v108 = vpop.f32.mrf.mxu0
    %109 = vdwg.mxu0
    %110 = vmatpush.bf16.msra.mxu0 0
    %111 = vmatpush.bf16.msra.mxu0 0
    %112 = vmatpush.bf16.msra.mxu0 0
    %113 = vmatpush.bf16.msra.mxu0 0
    %114 = vmatpush.bf16.msra.mxu0 0
    %115 = vmatpush.bf16.msra.mxu0 0
    %116 = vmatpush.bf16.msra.mxu0 0
    %117 = vmatpush.bf16.msra.mxu0 %v89
    %118 = vmatmul.bf16.gmra.mxu0 %v82
    %v119 = vpop.f32.mrf.mxu0
    %v120 = vadd.f32 %v57, %v119
    %v121 = vpop.f32.mrf.mxu0
    %122 = vdwg.mxu0
    %123 = vmatpush.bf16.msra.mxu0 0
    %124 = vmatpush.bf16.msra.mxu0 0
    %125 = vmatpush.bf16.msra.mxu0 0
    %126 = vmatpush.bf16.msra.mxu0 0
    %127 = vmatpush.bf16.msra.mxu0 0
    %128 = vmatpush.bf16.msra.mxu0 0
    %129 = vmatpush.bf16.msra.mxu0 0
    %130 = vmatpush.bf16.msra.mxu0 %v92
    %131 = vmatmul.bf16.gmra.mxu0 %v82
    %v132 = vpop.f32.mrf.mxu0
    %v133 = vadd.f32 %v58, %v132
    %v134 = vpop.f32.mrf.mxu0
    %135 = vdwg.mxu0
    %136 = vmatpush.bf16.msra.mxu0 0
    %137 = vmatpush.bf16.msra.mxu0 0
    %138 = vmatpush.bf16.msra.mxu0 0
    %139 = vmatpush.bf16.msra.mxu0 0
    %140 = vmatpush.bf16.msra.mxu0 0
    %141 = vmatpush.bf16.msra.mxu0 0
    %142 = vmatpush.bf16.msra.mxu0 0
    %143 = vmatpush.bf16.msra.mxu0 %v95
    %144 = vmatmul.bf16.gmra.mxu0 %v82
    %v145 = vpop.f32.mrf.mxu0
    %v146 = vadd.f32 %v59, %v145
    %v147 = vpop.f32.mrf.mxu0
    %148 = vdwg.mxu0
    %v149 = vmax.f32 %v107, 0.0
    %v150 = vmax.f32 %v120, 0.0
    %v151 = vmax.f32 %v133, 0.0
    %v152 = vmax.f32 %v146, 0.0
    %v153 = vpack.c.bf16 %v149, %v149
    %v154 = vpack.c.bf16 %v150, %v150
    %v155 = vpack.c.bf16 %v151, %v151
    %v156 = vpack.c.bf16 %v152, %v152
    %v157 = vld [vmem:[#allocation3] sm:$0xff]
    %v158 = vld [vmem:[#allocation3 + $0x8] sm:$0xff]
    %v159 = vld [vmem:[#allocation3 + $0x10] sm:$0xff]
    %v160 = vld [vmem:[#allocation3 + $0x18] sm:$0xff]
    %v161 = vld [vmem:[#allocation3 + $0x20] sm:$0xff]
    %v162 = vld [vmem:[#allocation3 + $0x28] sm:$0xff]
    %v163 = vld [vmem:[#allocation3 + $0x30] sm:$0xff]
    %v164 = vld [vmem:[#allocation3 + $0x38] sm:$0xff]
    %v165 = vld [vmem:[#allocation3 + $0x40] sm:$0xff]
    %v166 = vld [vmem:[#allocation3 + $0x48] sm:$0xff]
    %v167 = vld [vmem:[#allocation3 + $0x50] sm:$0xff]
    %v168 = vld [vmem:[#allocation3 + $0x58] sm:$0xff]
    %v169 = vld [vmem:[#allocation3 + $0x60] sm:$0xff]
    %v170 = vld [vmem:[#allocation3 + $0x68] sm:$0xff]
    %v171 = vld [vmem:[#allocation3 + $0x70] sm:$0xff]
    %v172 = vld [vmem:[#allocation3 + $0x78] sm:$0xff]
    %v173 = vld [vmem:[#allocation3 + $0x80] sm:$0xff]
    %v174 = vld [vmem:[#allocation3 + $0x88] sm:$0xff]
    %v175 = vld [vmem:[#allocation3 + $0x90] sm:$0xff]
    %v176 = vld [vmem:[#allocation3 + $0x98] sm:$0xff]
    %v177 = vld [vmem:[#allocation3 + $0xa0] sm:$0xff]
    %v178 = vld [vmem:[#allocation3 + $0xa8] sm:$0xff]
    %v179 = vld [vmem:[#allocation3 + $0xb0] sm:$0xff]
    %v180 = vld [vmem:[#allocation3 + $0xb8] sm:$0xff]
    %v181 = vld [vmem:[#allocation3 + $0xc0] sm:$0xff]
    %v182 = vld [vmem:[#allocation3 + $0xc8] sm:$0xff]
    %v183 = vld [vmem:[#allocation3 + $0xd0] sm:$0xff]
    %v184 = vld [vmem:[#allocation3 + $0xd8] sm:$0xff]
    %v185 = vld [vmem:[#allocation3 + $0xe0] sm:$0xff]
    %v186 = vld [vmem:[#allocation3 + $0xe8] sm:$0xff]
    %v187 = vld [vmem:[#allocation3 + $0xf0] sm:$0xff]
    %v188 = vld [vmem:[#allocation3 + $0xf8] sm:$0xff]
    %v189 = vld [vmem:[#allocation3 + $0x100] sm:$0xff]
    %v190 = vld [vmem:[#allocation3 + $0x108] sm:$0xff]
    %v191 = vld [vmem:[#allocation3 + $0x110] sm:$0xff]
    %v192 = vld [vmem:[#allocation3 + $0x118] sm:$0xff]
    %v193 = vld [vmem:[#allocation3 + $0x120] sm:$0xff]
    %v194 = vld [vmem:[#allocation3 + $0x128] sm:$0xff]
    %v195 = vld [vmem:[#allocation3 + $0x130] sm:$0xff]
    %v196 = vld [vmem:[#allocation3 + $0x138] sm:$0xff]
    %v197 = vld [vmem:[#allocation3 + $0x140] sm:$0xff]
    %v198 = vld [vmem:[#allocation3 + $0x148] sm:$0xff]
    %v199 = vld [vmem:[#allocation3 + $0x150] sm:$0xff]
    %v200 = vld [vmem:[#allocation3 + $0x158] sm:$0xff]
    %v201 = vld [vmem:[#allocation3 + $0x160] sm:$0xff]
    %v202 = vld [vmem:[#allocation3 + $0x168] sm:$0xff]
    %v203 = vld [vmem:[#allocation3 + $0x170] sm:$0xff]
    %v204 = vld [vmem:[#allocation3 + $0x178] sm:$0xff]
    %v205 = vld [vmem:[#allocation3 + $0x180] sm:$0xff]
    %v206 = vld [vmem:[#allocation3 + $0x188] sm:$0xff]
    %v207 = vld [vmem:[#allocation3 + $0x190] sm:$0xff]
    %v208 = vld [vmem:[#allocation3 + $0x198] sm:$0xff]
    %v209 = vld [vmem:[#allocation3 + $0x1a0] sm:$0xff]
    %v210 = vld [vmem:[#allocation3 + $0x1a8] sm:$0xff]
    %v211 = vld [vmem:[#allocation3 + $0x1b0] sm:$0xff]
    %v212 = vld [vmem:[#allocation3 + $0x1b8] sm:$0xff]
    %v213 = vld [vmem:[#allocation3 + $0x1c0] sm:$0xff]
    %v214 = vld [vmem:[#allocation3 + $0x1c8] sm:$0xff]
    %v215 = vld [vmem:[#allocation3 + $0x1d0] sm:$0xff]
    %v216 = vld [vmem:[#allocation3 + $0x1d8] sm:$0xff]
    %v217 = vld [vmem:[#allocation3 + $0x1e0] sm:$0xff]
    %v218 = vld [vmem:[#allocation3 + $0x1e8] sm:$0xff]
    %v219 = vld [vmem:[#allocation3 + $0x1f0] sm:$0xff]
    %v220 = vld [vmem:[#allocation3 + $0x1f8] sm:$0xff]
    %v221 = vld [vmem:[#allocation3 + $0x200] sm:$0xff]
    %v222 = vld [vmem:[#allocation3 + $0x208] sm:$0xff]
    %v223 = vld [vmem:[#allocation3 + $0x210] sm:$0xff]
    %v224 = vld [vmem:[#allocation3 + $0x218] sm:$0xff]
    %v225 = vld [vmem:[#allocation3 + $0x220] sm:$0xff]
    %v226 = vld [vmem:[#allocation3 + $0x228] sm:$0xff]
    %v227 = vld [vmem:[#allocation3 + $0x230] sm:$0xff]
    %v228 = vld [vmem:[#allocation3 + $0x238] sm:$0xff]
    %v229 = vld [vmem:[#allocation3 + $0x240] sm:$0xff]
    %v230 = vld [vmem:[#allocation3 + $0x248] sm:$0xff]
    %v231 = vld [vmem:[#allocation3 + $0x250] sm:$0xff]
    %v232 = vld [vmem:[#allocation3 + $0x258] sm:$0xff]
    %v233 = vld [vmem:[#allocation3 + $0x260] sm:$0xff]
    %v234 = vld [vmem:[#allocation3 + $0x268] sm:$0xff]
    %v235 = vld [vmem:[#allocation3 + $0x270] sm:$0xff]
    %v236 = vld [vmem:[#allocation3 + $0x278] sm:$0xff]
    %v237 = vld [vmem:[#allocation3 + $0x280] sm:$0xff]
    %v238 = vld [vmem:[#allocation3 + $0x288] sm:$0xff]
    %v239 = vld [vmem:[#allocation3 + $0x290] sm:$0xff]
    %v240 = vld [vmem:[#allocation3 + $0x298] sm:$0xff]
    %v241 = vld [vmem:[#allocation3 + $0x2a0] sm:$0xff]
    %v242 = vld [vmem:[#allocation3 + $0x2a8] sm:$0xff]
    %v243 = vld [vmem:[#allocation3 + $0x2b0] sm:$0xff]
    %v244 = vld [vmem:[#allocation3 + $0x2b8] sm:$0xff]
    %v245 = vld [vmem:[#allocation3 + $0x2c0] sm:$0xff]
    %v246 = vld [vmem:[#allocation3 + $0x2c8] sm:$0xff]
    %v247 = vld [vmem:[#allocation3 + $0x2d0] sm:$0xff]
    %v248 = vld [vmem:[#allocation3 + $0x2d8] sm:$0xff]
    %v249 = vld [vmem:[#allocation3 + $0x2e0] sm:$0xff]
    %v250 = vld [vmem:[#allocation3 + $0x2e8] sm:$0xff]
    %v251 = vld [vmem:[#allocation3 + $0x2f0] sm:$0xff]
    %v252 = vld [vmem:[#allocation3 + $0x2f8] sm:$0xff]
    %v253 = vld [vmem:[#allocation3 + $0x300] sm:$0xff]
    %v254 = vld [vmem:[#allocation3 + $0x308] sm:$0xff]
    %v255 = vld [vmem:[#allocation3 + $0x310] sm:$0xff]
    %v256 = vld [vmem:[#allocation3 + $0x318] sm:$0xff]
    %v257 = vld [vmem:[#allocation3 + $0x320] sm:$0xff]
    %v258 = vld [vmem:[#allocation3 + $0x328] sm:$0xff]
    %v259 = vld [vmem:[#allocation3 + $0x330] sm:$0xff]
    %v260 = vld [vmem:[#allocation3 + $0x338] sm:$0xff]
    %v261 = vld [vmem:[#allocation3 + $0x340] sm:$0xff]
    %v262 = vld [vmem:[#allocation3 + $0x348] sm:$0xff]
    %v263 = vld [vmem:[#allocation3 + $0x350] sm:$0xff]
    %v264 = vld [vmem:[#allocation3 + $0x358] sm:$0xff]
    %v265 = vld [vmem:[#allocation3 + $0x360] sm:$0xff]
    %v266 = vld [vmem:[#allocation3 + $0x368] sm:$0xff]
    %v267 = vld [vmem:[#allocation3 + $0x370] sm:$0xff]
    %v268 = vld [vmem:[#allocation3 + $0x378] sm:$0xff]
    %v269 = vld [vmem:[#allocation3 + $0x380] sm:$0xff]
    %v270 = vld [vmem:[#allocation3 + $0x388] sm:$0xff]
    %v271 = vld [vmem:[#allocation3 + $0x390] sm:$0xff]
    %v272 = vld [vmem:[#allocation3 + $0x398] sm:$0xff]
    %v273 = vld [vmem:[#allocation3 + $0x3a0] sm:$0xff]
    %v274 = vld [vmem:[#allocation3 + $0x3a8] sm:$0xff]
    %v275 = vld [vmem:[#allocation3 + $0x3b0] sm:$0xff]
    %v276 = vld [vmem:[#allocation3 + $0x3b8] sm:$0xff]
    %v277 = vld [vmem:[#allocation3 + $0x3c0] sm:$0xff]
    %v278 = vld [vmem:[#allocation3 + $0x3c8] sm:$0xff]
    %v279 = vld [vmem:[#allocation3 + $0x3d0] sm:$0xff]
    %v280 = vld [vmem:[#allocation3 + $0x3d8] sm:$0xff]
    %v281 = vld [vmem:[#allocation3 + $0x3e0] sm:$0xff]
    %v282 = vld [vmem:[#allocation3 + $0x3e8] sm:$0xff]
    %v283 = vld [vmem:[#allocation3 + $0x3f0] sm:$0xff]
    %v284 = vld [vmem:[#allocation3 + $0x3f8] sm:$0xff]
    %v286 = vperm.slane %v47, 0
    %v287 = vperm.slane %v47, 1
    %v288 = vperm.slane %v47, 2
    %v289 = vperm.slane %v47, 3
    %v422 = vunpack.c.l.b16 %v157
    %v423 = vunpack.c.h.b16 %v157
    %v424 = vunpack.c.l.b16 %v158
    %v425 = vunpack.c.h.b16 %v158
    %v426 = vunpack.c.l.b16 %v159
    %v427 = vunpack.c.h.b16 %v159
    %v428 = vunpack.c.l.b16 %v160
    %v429 = vunpack.c.h.b16 %v160
    %v430 = vunpack.c.l.b16 %v161
    %v431 = vunpack.c.h.b16 %v161
    %v432 = vunpack.c.l.b16 %v162
    %v433 = vunpack.c.h.b16 %v162
    %v434 = vunpack.c.l.b16 %v163
    %v435 = vunpack.c.h.b16 %v163
    %v436 = vunpack.c.l.b16 %v164
    %v437 = vunpack.c.h.b16 %v164
    %v438 = vunpack.c.l.b16 %v165
    %v439 = vunpack.c.h.b16 %v165
    %v440 = vunpack.c.l.b16 %v166
    %v441 = vunpack.c.h.b16 %v166
    %v442 = vunpack.c.l.b16 %v167
    %v443 = vunpack.c.h.b16 %v167
    %v444 = vunpack.c.l.b16 %v168
    %v445 = vunpack.c.h.b16 %v168
    %v446 = vunpack.c.l.b16 %v169
    %v447 = vunpack.c.h.b16 %v169
    %v448 = vunpack.c.l.b16 %v170
    %v449 = vunpack.c.h.b16 %v170
    %v450 = vunpack.c.l.b16 %v171
    %v451 = vunpack.c.h.b16 %v171
    %v452 = vunpack.c.l.b16 %v172
    %v453 = vunpack.c.h.b16 %v172
    %v454 = vunpack.c.l.b16 %v173
    %v455 = vunpack.c.h.b16 %v173
    %v456 = vunpack.c.l.b16 %v174
    %v457 = vunpack.c.h.b16 %v174
    %v458 = vunpack.c.l.b16 %v175
    %v459 = vunpack.c.h.b16 %v175
    %v460 = vunpack.c.l.b16 %v176
    %v461 = vunpack.c.h.b16 %v176
    %v462 = vunpack.c.l.b16 %v177
    %v463 = vunpack.c.h.b16 %v177
    %v464 = vunpack.c.l.b16 %v178
    %v465 = vunpack.c.h.b16 %v178
    %v466 = vunpack.c.l.b16 %v179
    %v467 = vunpack.c.h.b16 %v179
    %v468 = vunpack.c.l.b16 %v180
    %v469 = vunpack.c.h.b16 %v180
    %v470 = vunpack.c.l.b16 %v181
    %v471 = vunpack.c.h.b16 %v181
    %v472 = vunpack.c.l.b16 %v182
    %v473 = vunpack.c.h.b16 %v182
    %v474 = vunpack.c.l.b16 %v183
    %v475 = vunpack.c.h.b16 %v183
    %v476 = vunpack.c.l.b16 %v184
    %v477 = vunpack.c.h.b16 %v184
    %v478 = vunpack.c.l.b16 %v185
    %v479 = vunpack.c.h.b16 %v185
    %v480 = vunpack.c.l.b16 %v186
    %v481 = vunpack.c.h.b16 %v186
    %v482 = vunpack.c.l.b16 %v187
    %v483 = vunpack.c.h.b16 %v187
    %v484 = vunpack.c.l.b16 %v188
    %v485 = vunpack.c.h.b16 %v188
    %v486 = vunpack.c.l.b16 %v189
    %v487 = vunpack.c.h.b16 %v189
    %v488 = vunpack.c.l.b16 %v190
    %v489 = vunpack.c.h.b16 %v190
    %v490 = vunpack.c.l.b16 %v191
    %v491 = vunpack.c.h.b16 %v191
    %v492 = vunpack.c.l.b16 %v192
    %v493 = vunpack.c.h.b16 %v192
    %v494 = vunpack.c.l.b16 %v193
    %v495 = vunpack.c.h.b16 %v193
    %v496 = vunpack.c.l.b16 %v194
    %v497 = vunpack.c.h.b16 %v194
    %v498 = vunpack.c.l.b16 %v195
    %v499 = vunpack.c.h.b16 %v195
    %v500 = vunpack.c.l.b16 %v196
    %v501 = vunpack.c.h.b16 %v196
    %v502 = vunpack.c.l.b16 %v197
    %v503 = vunpack.c.h.b16 %v197
    %v504 = vunpack.c.l.b16 %v198
    %v505 = vunpack.c.h.b16 %v198
    %v506 = vunpack.c.l.b16 %v199
    %v507 = vunpack.c.h.b16 %v199
    %v508 = vunpack.c.l.b16 %v200
    %v509 = vunpack.c.h.b16 %v200
    %v510 = vunpack.c.l.b16 %v201
    %v511 = vunpack.c.h.b16 %v201
    %v512 = vunpack.c.l.b16 %v202
    %v513 = vunpack.c.h.b16 %v202
    %v514 = vunpack.c.l.b16 %v203
    %v515 = vunpack.c.h.b16 %v203
    %v516 = vunpack.c.l.b16 %v204
    %v517 = vunpack.c.h.b16 %v204
    %v518 = vunpack.c.l.b16 %v205
    %v519 = vunpack.c.h.b16 %v205
    %v520 = vunpack.c.l.b16 %v206
    %v521 = vunpack.c.h.b16 %v206
    %v522 = vunpack.c.l.b16 %v207
    %v523 = vunpack.c.h.b16 %v207
    %v524 = vunpack.c.l.b16 %v208
    %v525 = vunpack.c.h.b16 %v208
    %v526 = vunpack.c.l.b16 %v209
    %v527 = vunpack.c.h.b16 %v209
    %v528 = vunpack.c.l.b16 %v210
    %v529 = vunpack.c.h.b16 %v210
    %v530 = vunpack.c.l.b16 %v211
    %v531 = vunpack.c.h.b16 %v211
    %v532 = vunpack.c.l.b16 %v212
    %v533 = vunpack.c.h.b16 %v212
    %v534 = vunpack.c.l.b16 %v213
    %v535 = vunpack.c.h.b16 %v213
    %v536 = vunpack.c.l.b16 %v214
    %v537 = vunpack.c.h.b16 %v214
    %v538 = vunpack.c.l.b16 %v215
    %v539 = vunpack.c.h.b16 %v215
    %v540 = vunpack.c.l.b16 %v216
    %v541 = vunpack.c.h.b16 %v216
    %v542 = vunpack.c.l.b16 %v217
    %v543 = vunpack.c.h.b16 %v217
    %v544 = vunpack.c.l.b16 %v218
    %v545 = vunpack.c.h.b16 %v218
    %v546 = vunpack.c.l.b16 %v219
    %v547 = vunpack.c.h.b16 %v219
    %v548 = vunpack.c.l.b16 %v220
    %v549 = vunpack.c.h.b16 %v220
    %v550 = vunpack.c.l.b16 %v221
    %v551 = vunpack.c.h.b16 %v221
    %v552 = vunpack.c.l.b16 %v222
    %v553 = vunpack.c.h.b16 %v222
    %v554 = vunpack.c.l.b16 %v223
    %v555 = vunpack.c.h.b16 %v223
    %v556 = vunpack.c.l.b16 %v224
    %v557 = vunpack.c.h.b16 %v224
    %v558 = vunpack.c.l.b16 %v225
    %v559 = vunpack.c.h.b16 %v225
    %v560 = vunpack.c.l.b16 %v226
    %v561 = vunpack.c.h.b16 %v226
    %v562 = vunpack.c.l.b16 %v227
    %v563 = vunpack.c.h.b16 %v227
    %v564 = vunpack.c.l.b16 %v228
    %v565 = vunpack.c.h.b16 %v228
    %v566 = vunpack.c.l.b16 %v229
    %v567 = vunpack.c.h.b16 %v229
    %v568 = vunpack.c.l.b16 %v230
    %v569 = vunpack.c.h.b16 %v230
    %v570 = vunpack.c.l.b16 %v231
    %v571 = vunpack.c.h.b16 %v231
    %v572 = vunpack.c.l.b16 %v232
    %v573 = vunpack.c.h.b16 %v232
    %v574 = vunpack.c.l.b16 %v233
    %v575 = vunpack.c.h.b16 %v233
    %v576 = vunpack.c.l.b16 %v234
    %v577 = vunpack.c.h.b16 %v234
    %v578 = vunpack.c.l.b16 %v235
    %v579 = vunpack.c.h.b16 %v235
    %v580 = vunpack.c.l.b16 %v236
    %v581 = vunpack.c.h.b16 %v236
    %v582 = vunpack.c.l.b16 %v237
    %v583 = vunpack.c.h.b16 %v237
    %v584 = vunpack.c.l.b16 %v238
    %v585 = vunpack.c.h.b16 %v238
    %v586 = vunpack.c.l.b16 %v239
    %v587 = vunpack.c.h.b16 %v239
    %v588 = vunpack.c.l.b16 %v240
    %v589 = vunpack.c.h.b16 %v240
    %v590 = vunpack.c.l.b16 %v241
    %v591 = vunpack.c.h.b16 %v241
    %v592 = vunpack.c.l.b16 %v242
    %v593 = vunpack.c.h.b16 %v242
    %v594 = vunpack.c.l.b16 %v243
    %v595 = vunpack.c.h.b16 %v243
    %v596 = vunpack.c.l.b16 %v244
    %v597 = vunpack.c.h.b16 %v244
    %v598 = vunpack.c.l.b16 %v245
    %v599 = vunpack.c.h.b16 %v245
    %v600 = vunpack.c.l.b16 %v246
    %v601 = vunpack.c.h.b16 %v246
    %v602 = vunpack.c.l.b16 %v247
    %v603 = vunpack.c.h.b16 %v247
    %v604 = vunpack.c.l.b16 %v248
    %v605 = vunpack.c.h.b16 %v248
    %v606 = vunpack.c.l.b16 %v249
    %v607 = vunpack.c.h.b16 %v249
    %v608 = vunpack.c.l.b16 %v250
    %v609 = vunpack.c.h.b16 %v250
    %v610 = vunpack.c.l.b16 %v251
    %v611 = vunpack.c.h.b16 %v251
    %v612 = vunpack.c.l.b16 %v252
    %v613 = vunpack.c.h.b16 %v252
    %v614 = vunpack.c.l.b16 %v253
    %v615 = vunpack.c.h.b16 %v253
    %v616 = vunpack.c.l.b16 %v254
    %v617 = vunpack.c.h.b16 %v254
    %v618 = vunpack.c.l.b16 %v255
    %v619 = vunpack.c.h.b16 %v255
    %v620 = vunpack.c.l.b16 %v256
    %v621 = vunpack.c.h.b16 %v256
    %v622 = vunpack.c.l.b16 %v257
    %v623 = vunpack.c.h.b16 %v257
    %v624 = vunpack.c.l.b16 %v258
    %v625 = vunpack.c.h.b16 %v258
    %v626 = vunpack.c.l.b16 %v259
    %v627 = vunpack.c.h.b16 %v259
    %v628 = vunpack.c.l.b16 %v260
    %v629 = vunpack.c.h.b16 %v260
    %v630 = vunpack.c.l.b16 %v261
    %v631 = vunpack.c.h.b16 %v261
    %v632 = vunpack.c.l.b16 %v262
    %v633 = vunpack.c.h.b16 %v262
    %v634 = vunpack.c.l.b16 %v263
    %v635 = vunpack.c.h.b16 %v263
    %v636 = vunpack.c.l.b16 %v264
    %v637 = vunpack.c.h.b16 %v264
    %v638 = vunpack.c.l.b16 %v265
    %v639 = vunpack.c.h.b16 %v265
    %v640 = vunpack.c.l.b16 %v266
    %v641 = vunpack.c.h.b16 %v266
    %v642 = vunpack.c.l.b16 %v267
    %v643 = vunpack.c.h.b16 %v267
    %v644 = vunpack.c.l.b16 %v268
    %v645 = vunpack.c.h.b16 %v268
    %v646 = vunpack.c.l.b16 %v269
    %v647 = vunpack.c.h.b16 %v269
    %v648 = vunpack.c.l.b16 %v270
    %v649 = vunpack.c.h.b16 %v270
    %v650 = vunpack.c.l.b16 %v271
    %v651 = vunpack.c.h.b16 %v271
    %v652 = vunpack.c.l.b16 %v272
    %v653 = vunpack.c.h.b16 %v272
    %v654 = vunpack.c.l.b16 %v273
    %v655 = vunpack.c.h.b16 %v273
    %v656 = vunpack.c.l.b16 %v274
    %v657 = vunpack.c.h.b16 %v274
    %v658 = vunpack.c.l.b16 %v275
    %v659 = vunpack.c.h.b16 %v275
    %v660 = vunpack.c.l.b16 %v276
    %v661 = vunpack.c.h.b16 %v276
    %v662 = vunpack.c.l.b16 %v277
    %v663 = vunpack.c.h.b16 %v277
    %v664 = vunpack.c.l.b16 %v278
    %v665 = vunpack.c.h.b16 %v278
    %v666 = vunpack.c.l.b16 %v279
    %v667 = vunpack.c.h.b16 %v279
    %v668 = vunpack.c.l.b16 %v280
    %v669 = vunpack.c.h.b16 %v280
    %v670 = vunpack.c.l.b16 %v281
    %v671 = vunpack.c.h.b16 %v281
    %v672 = vunpack.c.l.b16 %v282
    %v673 = vunpack.c.h.b16 %v282
    %v674 = vunpack.c.l.b16 %v283
    %v675 = vunpack.c.h.b16 %v283
    %v676 = vunpack.c.l.b16 %v284
    %v677 = vunpack.c.h.b16 %v284
    %v678 = vpack.c.b16 %v426, %v422
    %v679 = vpack.c.b16 %v427, %v423
    %v680 = vpack.c.b16 %v428, %v424
    %v681 = vpack.c.b16 %v429, %v425
    %v682 = vpack.c.b16 %v434, %v430
    %v683 = vpack.c.b16 %v435, %v431
    %v684 = vpack.c.b16 %v436, %v432
    %v685 = vpack.c.b16 %v437, %v433
    %v686 = vpack.c.b16 %v442, %v438
    %v687 = vpack.c.b16 %v443, %v439
    %v688 = vpack.c.b16 %v444, %v440
    %v689 = vpack.c.b16 %v445, %v441
    %v690 = vpack.c.b16 %v450, %v446
    %v691 = vpack.c.b16 %v451, %v447
    %v692 = vpack.c.b16 %v452, %v448
    %v693 = vpack.c.b16 %v453, %v449
    %v694 = vpack.c.b16 %v458, %v454
    %v695 = vpack.c.b16 %v459, %v455
    %v696 = vpack.c.b16 %v460, %v456
    %v697 = vpack.c.b16 %v461, %v457
    %v698 = vpack.c.b16 %v466, %v462
    %v699 = vpack.c.b16 %v467, %v463
    %v700 = vpack.c.b16 %v468, %v464
    %v701 = vpack.c.b16 %v469, %v465
    %v702 = vpack.c.b16 %v474, %v470
    %v703 = vpack.c.b16 %v475, %v471
    %v704 = vpack.c.b16 %v476, %v472
    %v705 = vpack.c.b16 %v477, %v473
    %v706 = vpack.c.b16 %v482, %v478
    %v707 = vpack.c.b16 %v483, %v479
    %v708 = vpack.c.b16 %v484, %v480
    %v709 = vpack.c.b16 %v485, %v481
    %v710 = vpack.c.b16 %v490, %v486
    %v711 = vpack.c.b16 %v491, %v487
    %v712 = vpack.c.b16 %v492, %v488
    %v713 = vpack.c.b16 %v493, %v489
    %v714 = vpack.c.b16 %v498, %v494
    %v715 = vpack.c.b16 %v499, %v495
    %v716 = vpack.c.b16 %v500, %v496
    %v717 = vpack.c.b16 %v501, %v497
    %v718 = vpack.c.b16 %v506, %v502
    %v719 = vpack.c.b16 %v507, %v503
    %v720 = vpack.c.b16 %v508, %v504
    %v721 = vpack.c.b16 %v509, %v505
    %v722 = vpack.c.b16 %v514, %v510
    %v723 = vpack.c.b16 %v515, %v511
    %v724 = vpack.c.b16 %v516, %v512
    %v725 = vpack.c.b16 %v517, %v513
    %v726 = vpack.c.b16 %v522, %v518
    %v727 = vpack.c.b16 %v523, %v519
    %v728 = vpack.c.b16 %v524, %v520
    %v729 = vpack.c.b16 %v525, %v521
    %v730 = vpack.c.b16 %v530, %v526
    %v731 = vpack.c.b16 %v531, %v527
    %v732 = vpack.c.b16 %v532, %v528
    %v733 = vpack.c.b16 %v533, %v529
    %v734 = vpack.c.b16 %v538, %v534
    %v735 = vpack.c.b16 %v539, %v535
    %v736 = vpack.c.b16 %v540, %v536
    %v737 = vpack.c.b16 %v541, %v537
    %v738 = vpack.c.b16 %v546, %v542
    %v739 = vpack.c.b16 %v547, %v543
    %v740 = vpack.c.b16 %v548, %v544
    %v741 = vpack.c.b16 %v549, %v545
    %v742 = vpack.c.b16 %v554, %v550
    %v743 = vpack.c.b16 %v555, %v551
    %v744 = vpack.c.b16 %v556, %v552
    %v745 = vpack.c.b16 %v557, %v553
    %v746 = vpack.c.b16 %v562, %v558
    %v747 = vpack.c.b16 %v563, %v559
    %v748 = vpack.c.b16 %v564, %v560
    %v749 = vpack.c.b16 %v565, %v561
    %v750 = vpack.c.b16 %v570, %v566
    %v751 = vpack.c.b16 %v571, %v567
    %v752 = vpack.c.b16 %v572, %v568
    %v753 = vpack.c.b16 %v573, %v569
    %v754 = vpack.c.b16 %v578, %v574
    %v755 = vpack.c.b16 %v579, %v575
    %v756 = vpack.c.b16 %v580, %v576
    %v757 = vpack.c.b16 %v581, %v577
    %v758 = vpack.c.b16 %v586, %v582
    %v759 = vpack.c.b16 %v587, %v583
    %v760 = vpack.c.b16 %v588, %v584
    %v761 = vpack.c.b16 %v589, %v585
    %v762 = vpack.c.b16 %v594, %v590
    %v763 = vpack.c.b16 %v595, %v591
    %v764 = vpack.c.b16 %v596, %v592
    %v765 = vpack.c.b16 %v597, %v593
    %v766 = vpack.c.b16 %v602, %v598
    %v767 = vpack.c.b16 %v603, %v599
    %v768 = vpack.c.b16 %v604, %v600
    %v769 = vpack.c.b16 %v605, %v601
    %v770 = vpack.c.b16 %v610, %v606
    %v771 = vpack.c.b16 %v611, %v607
    %v772 = vpack.c.b16 %v612, %v608
    %v773 = vpack.c.b16 %v613, %v609
    %v774 = vpack.c.b16 %v618, %v614
    %v775 = vpack.c.b16 %v619, %v615
    %v776 = vpack.c.b16 %v620, %v616
    %v777 = vpack.c.b16 %v621, %v617
    %v778 = vpack.c.b16 %v626, %v622
    %v779 = vpack.c.b16 %v627, %v623
    %v780 = vpack.c.b16 %v628, %v624
    %v781 = vpack.c.b16 %v629, %v625
    %v782 = vpack.c.b16 %v634, %v630
    %v783 = vpack.c.b16 %v635, %v631
    %v784 = vpack.c.b16 %v636, %v632
    %v785 = vpack.c.b16 %v637, %v633
    %v786 = vpack.c.b16 %v642, %v638
    %v787 = vpack.c.b16 %v643, %v639
    %v788 = vpack.c.b16 %v644, %v640
    %v789 = vpack.c.b16 %v645, %v641
    %v790 = vpack.c.b16 %v650, %v646
    %v791 = vpack.c.b16 %v651, %v647
    %v792 = vpack.c.b16 %v652, %v648
    %v793 = vpack.c.b16 %v653, %v649
    %v794 = vpack.c.b16 %v658, %v654
    %v795 = vpack.c.b16 %v659, %v655
    %v796 = vpack.c.b16 %v660, %v656
    %v797 = vpack.c.b16 %v661, %v657
    %v798 = vpack.c.b16 %v666, %v662
    %v799 = vpack.c.b16 %v667, %v663
    %v800 = vpack.c.b16 %v668, %v664
    %v801 = vpack.c.b16 %v669, %v665
    %v802 = vpack.c.b16 %v674, %v670
    %v803 = vpack.c.b16 %v675, %v671
    %v804 = vpack.c.b16 %v676, %v672
    %v805 = vpack.c.b16 %v677, %v673
    %934 = vmatpush.bf16.msra.mxu0 %v706
    %935 = vmatpush.bf16.msra.mxu0 %v702
    %936 = vmatpush.bf16.msra.mxu0 %v698
    %937 = vmatpush.bf16.msra.mxu0 %v694
    %938 = vmatpush.bf16.msra.mxu0 %v690
    %939 = vmatpush.bf16.msra.mxu0 %v686
    %940 = vmatpush.bf16.msra.mxu0 %v682
    %941 = vmatpush.bf16.msra.mxu0 %v678
    %942 = vmatmul.bf16.gmra.mxu0 %v153
    %v943 = vpop.f32.mrf.mxu0
    %v944 = vadd.f32 %v286, %v943
    %v945 = vpop.f32.mrf.mxu0
    %946 = vdwg.mxu0
    %947 = vmatpush.bf16.msra.mxu0 %v738
    %948 = vmatpush.bf16.msra.mxu0 %v734
    %949 = vmatpush.bf16.msra.mxu0 %v730
    %950 = vmatpush.bf16.msra.mxu0 %v726
    %951 = vmatpush.bf16.msra.mxu0 %v722
    %952 = vmatpush.bf16.msra.mxu0 %v718
    %953 = vmatpush.bf16.msra.mxu0 %v714
    %954 = vmatpush.bf16.msra.mxu0 %v710
    %955 = vmatmul.bf16.gmra.mxu0 %v154
    %v956 = vpop.f32.mrf.mxu0
    %v957 = vadd.f32 %v944, %v956
    %v958 = vpop.f32.mrf.mxu0
    %959 = vdwg.mxu0
    %960 = vmatpush.bf16.msra.mxu0 %v770
    %961 = vmatpush.bf16.msra.mxu0 %v766
    %962 = vmatpush.bf16.msra.mxu0 %v762
    %963 = vmatpush.bf16.msra.mxu0 %v758
    %964 = vmatpush.bf16.msra.mxu0 %v754
    %965 = vmatpush.bf16.msra.mxu0 %v750
    %966 = vmatpush.bf16.msra.mxu0 %v746
    %967 = vmatpush.bf16.msra.mxu0 %v742
    %968 = vmatmul.bf16.gmra.mxu0 %v155
    %v969 = vpop.f32.mrf.mxu0
    %v970 = vadd.f32 %v957, %v969
    %v971 = vpop.f32.mrf.mxu0
    %972 = vdwg.mxu0
    %973 = vmatpush.bf16.msra.mxu0 %v802
    %974 = vmatpush.bf16.msra.mxu0 %v798
    %975 = vmatpush.bf16.msra.mxu0 %v794
    %976 = vmatpush.bf16.msra.mxu0 %v790
    %977 = vmatpush.bf16.msra.mxu0 %v786
    %978 = vmatpush.bf16.msra.mxu0 %v782
    %979 = vmatpush.bf16.msra.mxu0 %v778
    %980 = vmatpush.bf16.msra.mxu0 %v774
    %981 = vmatmul.bf16.gmra.mxu0 %v156
    %v982 = vpop.f32.mrf.mxu0
    %v983 = vadd.f32 %v970, %v982
    %v984 = vpop.f32.mrf.mxu0
    %985 = vdwg.mxu0
    %986 = vmatpush.bf16.msra.mxu0 %v707
    %987 = vmatpush.bf16.msra.mxu0 %v703
    %988 = vmatpush.bf16.msra.mxu0 %v699
    %989 = vmatpush.bf16.msra.mxu0 %v695
    %990 = vmatpush.bf16.msra.mxu0 %v691
    %991 = vmatpush.bf16.msra.mxu0 %v687
    %992 = vmatpush.bf16.msra.mxu0 %v683
    %993 = vmatpush.bf16.msra.mxu0 %v679
    %994 = vmatmul.bf16.gmra.mxu0 %v153
    %v995 = vpop.f32.mrf.mxu0
    %v996 = vadd.f32 %v287, %v995
    %v997 = vpop.f32.mrf.mxu0
    %998 = vdwg.mxu0
    %999 = vmatpush.bf16.msra.mxu0 %v739
    %1000 = vmatpush.bf16.msra.mxu0 %v735
    %1001 = vmatpush.bf16.msra.mxu0 %v731
    %1002 = vmatpush.bf16.msra.mxu0 %v727
    %1003 = vmatpush.bf16.msra.mxu0 %v723
    %1004 = vmatpush.bf16.msra.mxu0 %v719
    %1005 = vmatpush.bf16.msra.mxu0 %v715
    %1006 = vmatpush.bf16.msra.mxu0 %v711
    %1007 = vmatmul.bf16.gmra.mxu0 %v154
    %v1008 = vpop.f32.mrf.mxu0
    %v1009 = vadd.f32 %v996, %v1008
    %v1010 = vpop.f32.mrf.mxu0
    %1011 = vdwg.mxu0
    %1012 = vmatpush.bf16.msra.mxu0 %v771
    %1013 = vmatpush.bf16.msra.mxu0 %v767
    %1014 = vmatpush.bf16.msra.mxu0 %v763
    %1015 = vmatpush.bf16.msra.mxu0 %v759
    %1016 = vmatpush.bf16.msra.mxu0 %v755
    %1017 = vmatpush.bf16.msra.mxu0 %v751
    %1018 = vmatpush.bf16.msra.mxu0 %v747
    %1019 = vmatpush.bf16.msra.mxu0 %v743
    %1020 = vmatmul.bf16.gmra.mxu0 %v155
    %v1021 = vpop.f32.mrf.mxu0
    %v1022 = vadd.f32 %v1009, %v1021
    %v1023 = vpop.f32.mrf.mxu0
    %1024 = vdwg.mxu0
    %1025 = vmatpush.bf16.msra.mxu0 %v803
    %1026 = vmatpush.bf16.msra.mxu0 %v799
    %1027 = vmatpush.bf16.msra.mxu0 %v795
    %1028 = vmatpush.bf16.msra.mxu0 %v791
    %1029 = vmatpush.bf16.msra.mxu0 %v787
    %1030 = vmatpush.bf16.msra.mxu0 %v783
    %1031 = vmatpush.bf16.msra.mxu0 %v779
    %1032 = vmatpush.bf16.msra.mxu0 %v775
    %1033 = vmatmul.bf16.gmra.mxu0 %v156
    %v1034 = vpop.f32.mrf.mxu0
    %v1035 = vadd.f32 %v1022, %v1034
    %v1036 = vpop.f32.mrf.mxu0
    %1037 = vdwg.mxu0
    %1038 = vmatpush.bf16.msra.mxu0 %v708
    %1039 = vmatpush.bf16.msra.mxu0 %v704
    %1040 = vmatpush.bf16.msra.mxu0 %v700
    %1041 = vmatpush.bf16.msra.mxu0 %v696
    %1042 = vmatpush.bf16.msra.mxu0 %v692
    %1043 = vmatpush.bf16.msra.mxu0 %v688
    %1044 = vmatpush.bf16.msra.mxu0 %v684
    %1045 = vmatpush.bf16.msra.mxu0 %v680
    %1046 = vmatmul.bf16.gmra.mxu0 %v153
    %v1047 = vpop.f32.mrf.mxu0
    %v1048 = vadd.f32 %v288, %v1047
    %v1049 = vpop.f32.mrf.mxu0
    %1050 = vdwg.mxu0
    %1051 = vmatpush.bf16.msra.mxu0 %v740
    %1052 = vmatpush.bf16.msra.mxu0 %v736
    %1053 = vmatpush.bf16.msra.mxu0 %v732
    %1054 = vmatpush.bf16.msra.mxu0 %v728
    %1055 = vmatpush.bf16.msra.mxu0 %v724
    %1056 = vmatpush.bf16.msra.mxu0 %v720
    %1057 = vmatpush.bf16.msra.mxu0 %v716
    %1058 = vmatpush.bf16.msra.mxu0 %v712
    %1059 = vmatmul.bf16.gmra.mxu0 %v154
    %v1060 = vpop.f32.mrf.mxu0
    %v1061 = vadd.f32 %v1048, %v1060
    %v1062 = vpop.f32.mrf.mxu0
    %1063 = vdwg.mxu0
    %1064 = vmatpush.bf16.msra.mxu0 %v772
    %1065 = vmatpush.bf16.msra.mxu0 %v768
    %1066 = vmatpush.bf16.msra.mxu0 %v764
    %1067 = vmatpush.bf16.msra.mxu0 %v760
    %1068 = vmatpush.bf16.msra.mxu0 %v756
    %1069 = vmatpush.bf16.msra.mxu0 %v752
    %1070 = vmatpush.bf16.msra.mxu0 %v748
    %1071 = vmatpush.bf16.msra.mxu0 %v744
    %1072 = vmatmul.bf16.gmra.mxu0 %v155
    %v1073 = vpop.f32.mrf.mxu0
    %v1074 = vadd.f32 %v1061, %v1073
    %v1075 = vpop.f32.mrf.mxu0
    %1076 = vdwg.mxu0
    %1077 = vmatpush.bf16.msra.mxu0 %v804
    %1078 = vmatpush.bf16.msra.mxu0 %v800
    %1079 = vmatpush.bf16.msra.mxu0 %v796
    %1080 = vmatpush.bf16.msra.mxu0 %v792
    %1081 = vmatpush.bf16.msra.mxu0 %v788
    %1082 = vmatpush.bf16.msra.mxu0 %v784
    %1083 = vmatpush.bf16.msra.mxu0 %v780
    %1084 = vmatpush.bf16.msra.mxu0 %v776
    %1085 = vmatmul.bf16.gmra.mxu0 %v156
    %v1086 = vpop.f32.mrf.mxu0
    %v1087 = vadd.f32 %v1074, %v1086
    %v1088 = vpop.f32.mrf.mxu0
    %1089 = vdwg.mxu0
    %1090 = vmatpush.bf16.msra.mxu0 %v709
    %1091 = vmatpush.bf16.msra.mxu0 %v705
    %1092 = vmatpush.bf16.msra.mxu0 %v701
    %1093 = vmatpush.bf16.msra.mxu0 %v697
    %1094 = vmatpush.bf16.msra.mxu0 %v693
    %1095 = vmatpush.bf16.msra.mxu0 %v689
    %1096 = vmatpush.bf16.msra.mxu0 %v685
    %1097 = vmatpush.bf16.msra.mxu0 %v681
    %1098 = vmatmul.bf16.gmra.mxu0 %v153
    %v1099 = vpop.f32.mrf.mxu0
    %v1100 = vadd.f32 %v289, %v1099
    %v1101 = vpop.f32.mrf.mxu0
    %1102 = vdwg.mxu0
    %1103 = vmatpush.bf16.msra.mxu0 %v741
    %1104 = vmatpush.bf16.msra.mxu0 %v737
    %1105 = vmatpush.bf16.msra.mxu0 %v733
    %1106 = vmatpush.bf16.msra.mxu0 %v729
    %1107 = vmatpush.bf16.msra.mxu0 %v725
    %1108 = vmatpush.bf16.msra.mxu0 %v721
    %1109 = vmatpush.bf16.msra.mxu0 %v717
    %1110 = vmatpush.bf16.msra.mxu0 %v713
    %1111 = vmatmul.bf16.gmra.mxu0 %v154
    %v1112 = vpop.f32.mrf.mxu0
    %v1113 = vadd.f32 %v1100, %v1112
    %v1114 = vpop.f32.mrf.mxu0
    %1115 = vdwg.mxu0
    %1116 = vmatpush.bf16.msra.mxu0 %v773
    %1117 = vmatpush.bf16.msra.mxu0 %v769
    %1118 = vmatpush.bf16.msra.mxu0 %v765
    %1119 = vmatpush.bf16.msra.mxu0 %v761
    %1120 = vmatpush.bf16.msra.mxu0 %v757
    %1121 = vmatpush.bf16.msra.mxu0 %v753
    %1122 = vmatpush.bf16.msra.mxu0 %v749
    %1123 = vmatpush.bf16.msra.mxu0 %v745
    %1124 = vmatmul.bf16.gmra.mxu0 %v155
    %v1125 = vpop.f32.mrf.mxu0
    %v1126 = vadd.f32 %v1113, %v1125
    %v1127 = vpop.f32.mrf.mxu0
    %1128 = vdwg.mxu0
    %1129 = vmatpush.bf16.msra.mxu0 %v805
    %1130 = vmatpush.bf16.msra.mxu0 %v801
    %1131 = vmatpush.bf16.msra.mxu0 %v797
    %1132 = vmatpush.bf16.msra.mxu0 %v793
    %1133 = vmatpush.bf16.msra.mxu0 %v789
    %1134 = vmatpush.bf16.msra.mxu0 %v785
    %1135 = vmatpush.bf16.msra.mxu0 %v781
    %1136 = vmatpush.bf16.msra.mxu0 %v777
    %1137 = vmatmul.bf16.gmra.mxu0 %v156
    %v1138 = vpop.f32.mrf.mxu0
    %v1139 = vadd.f32 %v1126, %v1138
    %v1140 = vpop.f32.mrf.mxu0
    %1141 = vdwg.mxu0
    %v1142 = vmax.f32 %v983, 0.0
    %v1143 = vmax.f32 %v1035, 0.0
    %v1144 = vmax.f32 %v1087, 0.0
    %v1145 = vmax.f32 %v1139, 0.0
    %v1146 = vpack.c.bf16 %v1142, %v1142
    %v1147 = vpack.c.bf16 %v1143, %v1143
    %v1148 = vpack.c.bf16 %v1144, %v1144
    %v1149 = vpack.c.bf16 %v1145, %v1145
    %v1150 = vld [vmem:[%s5] sm:$0xf]
    %v1151 = vld [vmem:[%s5 + $0x4] sm:$0xf]
    %v1152 = vld [vmem:[%s5 + $0x8] sm:$0xf]
    %v1153 = vld [vmem:[%s5 + $0xc] sm:$0xf]
    %v1154 = vld [vmem:[%s5 + $0x10] sm:$0xf]
    %v1155 = vld [vmem:[%s5 + $0x14] sm:$0xf]
    %v1156 = vld [vmem:[%s5 + $0x18] sm:$0xf]
    %v1157 = vld [vmem:[%s5 + $0x1c] sm:$0xf]
    %v1158 = vld [vmem:[%s5 + $0x20] sm:$0xf]
    %v1159 = vld [vmem:[%s5 + $0x24] sm:$0xf]
    %v1160 = vld [vmem:[%s5 + $0x28] sm:$0xf]
    %v1161 = vld [vmem:[%s5 + $0x2c] sm:$0xf]
    %v1162 = vld [vmem:[%s5 + $0x30] sm:$0xf]
    %v1163 = vld [vmem:[%s5 + $0x34] sm:$0xf]
    %v1164 = vld [vmem:[%s5 + $0x38] sm:$0xf]
    %v1165 = vld [vmem:[%s5 + $0x3c] sm:$0xf]
    %v1166 = vld [vmem:[%s5 + $0x40] sm:$0xf]
    %v1167 = vld [vmem:[%s5 + $0x44] sm:$0xf]
    %v1168 = vld [vmem:[%s5 + $0x48] sm:$0xf]
    %v1169 = vld [vmem:[%s5 + $0x4c] sm:$0xf]
    %v1170 = vld [vmem:[%s5 + $0x50] sm:$0xf]
    %v1171 = vld [vmem:[%s5 + $0x54] sm:$0xf]
    %v1172 = vld [vmem:[%s5 + $0x58] sm:$0xf]
    %v1173 = vld [vmem:[%s5 + $0x5c] sm:$0xf]
    %v1174 = vld [vmem:[%s5 + $0x60] sm:$0xf]
    %v1175 = vld [vmem:[%s5 + $0x64] sm:$0xf]
    %v1176 = vld [vmem:[%s5 + $0x68] sm:$0xf]
    %v1177 = vld [vmem:[%s5 + $0x6c] sm:$0xf]
    %v1178 = vld [vmem:[%s5 + $0x70] sm:$0xf]
    %v1179 = vld [vmem:[%s5 + $0x74] sm:$0xf]
    %v1180 = vld [vmem:[%s5 + $0x78] sm:$0xf]
    %v1181 = vld [vmem:[%s5 + $0x7c] sm:$0xf]
    %v1182 = vld [vmem:[%s5 + $0x80] sm:$0xf]
    %v1183 = vld [vmem:[%s5 + $0x84] sm:$0xf]
    %v1184 = vld [vmem:[%s5 + $0x88] sm:$0xf]
    %v1185 = vld [vmem:[%s5 + $0x8c] sm:$0xf]
    %v1186 = vld [vmem:[%s5 + $0x90] sm:$0xf]
    %v1187 = vld [vmem:[%s5 + $0x94] sm:$0xf]
    %v1188 = vld [vmem:[%s5 + $0x98] sm:$0xf]
    %v1189 = vld [vmem:[%s5 + $0x9c] sm:$0xf]
    %v1190 = vld [vmem:[%s5 + $0xa0] sm:$0xf]
    %v1191 = vld [vmem:[%s5 + $0xa4] sm:$0xf]
    %v1192 = vld [vmem:[%s5 + $0xa8] sm:$0xf]
    %v1193 = vld [vmem:[%s5 + $0xac] sm:$0xf]
    %v1194 = vld [vmem:[%s5 + $0xb0] sm:$0xf]
    %v1195 = vld [vmem:[%s5 + $0xb4] sm:$0xf]
    %v1196 = vld [vmem:[%s5 + $0xb8] sm:$0xf]
    %v1197 = vld [vmem:[%s5 + $0xbc] sm:$0xf]
    %v1198 = vld [vmem:[%s5 + $0xc0] sm:$0xf]
    %v1199 = vld [vmem:[%s5 + $0xc4] sm:$0xf]
    %v1200 = vld [vmem:[%s5 + $0xc8] sm:$0xf]
    %v1201 = vld [vmem:[%s5 + $0xcc] sm:$0xf]
    %v1202 = vld [vmem:[%s5 + $0xd0] sm:$0xf]
    %v1203 = vld [vmem:[%s5 + $0xd4] sm:$0xf]
    %v1204 = vld [vmem:[%s5 + $0xd8] sm:$0xf]
    %v1205 = vld [vmem:[%s5 + $0xdc] sm:$0xf]
    %v1206 = vld [vmem:[%s5 + $0xe0] sm:$0xf]
    %v1207 = vld [vmem:[%s5 + $0xe4] sm:$0xf]
    %v1208 = vld [vmem:[%s5 + $0xe8] sm:$0xf]
    %v1209 = vld [vmem:[%s5 + $0xec] sm:$0xf]
    %v1210 = vld [vmem:[%s5 + $0xf0] sm:$0xf]
    %v1211 = vld [vmem:[%s5 + $0xf4] sm:$0xf]
    %v1212 = vld [vmem:[%s5 + $0xf8] sm:$0xf]
    %v1213 = vld [vmem:[%s5 + $0xfc] sm:$0xf]
    %v1215 = vperm.slane %v48, 0
    %v1281 = vunpack.c.l.b16 %v1150
    %v1282 = vunpack.c.l.b16 %v1151
    %v1283 = vunpack.c.l.b16 %v1152
    %v1284 = vunpack.c.l.b16 %v1153
    %v1285 = vunpack.c.l.b16 %v1154
    %v1286 = vunpack.c.l.b16 %v1155
    %v1287 = vunpack.c.l.b16 %v1156
    %v1288 = vunpack.c.l.b16 %v1157
    %v1289 = vunpack.c.l.b16 %v1158
    %v1290 = vunpack.c.l.b16 %v1159
    %v1291 = vunpack.c.l.b16 %v1160
    %v1292 = vunpack.c.l.b16 %v1161
    %v1293 = vunpack.c.l.b16 %v1162
    %v1294 = vunpack.c.l.b16 %v1163
    %v1295 = vunpack.c.l.b16 %v1164
    %v1296 = vunpack.c.l.b16 %v1165
    %v1297 = vunpack.c.l.b16 %v1166
    %v1298 = vunpack.c.l.b16 %v1167
    %v1299 = vunpack.c.l.b16 %v1168
    %v1300 = vunpack.c.l.b16 %v1169
    %v1301 = vunpack.c.l.b16 %v1170
    %v1302 = vunpack.c.l.b16 %v1171
    %v1303 = vunpack.c.l.b16 %v1172
    %v1304 = vunpack.c.l.b16 %v1173
    %v1305 = vunpack.c.l.b16 %v1174
    %v1306 = vunpack.c.l.b16 %v1175
    %v1307 = vunpack.c.l.b16 %v1176
    %v1308 = vunpack.c.l.b16 %v1177
    %v1309 = vunpack.c.l.b16 %v1178
    %v1310 = vunpack.c.l.b16 %v1179
    %v1311 = vunpack.c.l.b16 %v1180
    %v1312 = vunpack.c.l.b16 %v1181
    %v1313 = vunpack.c.l.b16 %v1182
    %v1314 = vunpack.c.l.b16 %v1183
    %v1315 = vunpack.c.l.b16 %v1184
    %v1316 = vunpack.c.l.b16 %v1185
    %v1317 = vunpack.c.l.b16 %v1186
    %v1318 = vunpack.c.l.b16 %v1187
    %v1319 = vunpack.c.l.b16 %v1188
    %v1320 = vunpack.c.l.b16 %v1189
    %v1321 = vunpack.c.l.b16 %v1190
    %v1322 = vunpack.c.l.b16 %v1191
    %v1323 = vunpack.c.l.b16 %v1192
    %v1324 = vunpack.c.l.b16 %v1193
    %v1325 = vunpack.c.l.b16 %v1194
    %v1326 = vunpack.c.l.b16 %v1195
    %v1327 = vunpack.c.l.b16 %v1196
    %v1328 = vunpack.c.l.b16 %v1197
    %v1329 = vunpack.c.l.b16 %v1198
    %v1330 = vunpack.c.l.b16 %v1199
    %v1331 = vunpack.c.l.b16 %v1200
    %v1332 = vunpack.c.l.b16 %v1201
    %v1333 = vunpack.c.l.b16 %v1202
    %v1334 = vunpack.c.l.b16 %v1203
    %v1335 = vunpack.c.l.b16 %v1204
    %v1336 = vunpack.c.l.b16 %v1205
    %v1337 = vunpack.c.l.b16 %v1206
    %v1338 = vunpack.c.l.b16 %v1207
    %v1339 = vunpack.c.l.b16 %v1208
    %v1340 = vunpack.c.l.b16 %v1209
    %v1341 = vunpack.c.l.b16 %v1210
    %v1342 = vunpack.c.l.b16 %v1211
    %v1343 = vunpack.c.l.b16 %v1212
    %v1344 = vunpack.c.l.b16 %v1213
    %v1345 = vpack.c.b16 %v1282, %v1281
    %v1346 = vpack.c.b16 %v1284, %v1283
    %v1347 = vpack.c.b16 %v1286, %v1285
    %v1348 = vpack.c.b16 %v1288, %v1287
    %v1349 = vpack.c.b16 %v1290, %v1289
    %v1350 = vpack.c.b16 %v1292, %v1291
    %v1351 = vpack.c.b16 %v1294, %v1293
    %v1352 = vpack.c.b16 %v1296, %v1295
    %v1353 = vpack.c.b16 %v1298, %v1297
    %v1354 = vpack.c.b16 %v1300, %v1299
    %v1355 = vpack.c.b16 %v1302, %v1301
    %v1356 = vpack.c.b16 %v1304, %v1303
    %v1357 = vpack.c.b16 %v1306, %v1305
    %v1358 = vpack.c.b16 %v1308, %v1307
    %v1359 = vpack.c.b16 %v1310, %v1309
    %v1360 = vpack.c.b16 %v1312, %v1311
    %v1361 = vpack.c.b16 %v1314, %v1313
    %v1362 = vpack.c.b16 %v1316, %v1315
    %v1363 = vpack.c.b16 %v1318, %v1317
    %v1364 = vpack.c.b16 %v1320, %v1319
    %v1365 = vpack.c.b16 %v1322, %v1321
    %v1366 = vpack.c.b16 %v1324, %v1323
    %v1367 = vpack.c.b16 %v1326, %v1325
    %v1368 = vpack.c.b16 %v1328, %v1327
    %v1369 = vpack.c.b16 %v1330, %v1329
    %v1370 = vpack.c.b16 %v1332, %v1331
    %v1371 = vpack.c.b16 %v1334, %v1333
    %v1372 = vpack.c.b16 %v1336, %v1335
    %v1373 = vpack.c.b16 %v1338, %v1337
    %v1374 = vpack.c.b16 %v1340, %v1339
    %v1375 = vpack.c.b16 %v1342, %v1341
    %v1376 = vpack.c.b16 %v1344, %v1343
    %1409 = vmatpush.bf16.msra.mxu0 %v1352
    %1410 = vmatpush.bf16.msra.mxu0 %v1351
    %1411 = vmatpush.bf16.msra.mxu0 %v1350
    %1412 = vmatpush.bf16.msra.mxu0 %v1349
    %1413 = vmatpush.bf16.msra.mxu0 %v1348
    %1414 = vmatpush.bf16.msra.mxu0 %v1347
    %1415 = vmatpush.bf16.msra.mxu0 %v1346
    %1416 = vmatpush.bf16.msra.mxu0 %v1345
    %1417 = vmatmul.bf16.gmra.mxu0 %v1146
    %v1418 = vpop.f32.mrf.mxu0
    %v1419 = vadd.f32 %v1215, %v1418
    %v1420 = vpop.f32.mrf.mxu0
    %1421 = vdwg.mxu0
    %1422 = vmatpush.bf16.msra.mxu0 %v1360
    %1423 = vmatpush.bf16.msra.mxu0 %v1359
    %1424 = vmatpush.bf16.msra.mxu0 %v1358
    %1425 = vmatpush.bf16.msra.mxu0 %v1357
    %1426 = vmatpush.bf16.msra.mxu0 %v1356
    %1427 = vmatpush.bf16.msra.mxu0 %v1355
    %1428 = vmatpush.bf16.msra.mxu0 %v1354
    %1429 = vmatpush.bf16.msra.mxu0 %v1353
    %1430 = vmatmul.bf16.gmra.mxu0 %v1147
    %v1431 = vpop.f32.mrf.mxu0
    %v1432 = vadd.f32 %v1419, %v1431
    %v1433 = vpop.f32.mrf.mxu0
    %1434 = vdwg.mxu0
    %1435 = vmatpush.bf16.msra.mxu0 %v1368
    %1436 = vmatpush.bf16.msra.mxu0 %v1367
    %1437 = vmatpush.bf16.msra.mxu0 %v1366
    %1438 = vmatpush.bf16.msra.mxu0 %v1365
    %1439 = vmatpush.bf16.msra.mxu0 %v1364
    %1440 = vmatpush.bf16.msra.mxu0 %v1363
    %1441 = vmatpush.bf16.msra.mxu0 %v1362
    %1442 = vmatpush.bf16.msra.mxu0 %v1361
    %1443 = vmatmul.bf16.gmra.mxu0 %v1148
    %v1444 = vpop.f32.mrf.mxu0
    %v1445 = vadd.f32 %v1432, %v1444
    %v1446 = vpop.f32.mrf.mxu0
    %1447 = vdwg.mxu0
    %1448 = vmatpush.bf16.msra.mxu0 %v1376
    %1449 = vmatpush.bf16.msra.mxu0 %v1375
    %1450 = vmatpush.bf16.msra.mxu0 %v1374
    %1451 = vmatpush.bf16.msra.mxu0 %v1373
    %1452 = vmatpush.bf16.msra.mxu0 %v1372
    %1453 = vmatpush.bf16.msra.mxu0 %v1371
    %1454 = vmatpush.bf16.msra.mxu0 %v1370
    %1455 = vmatpush.bf16.msra.mxu0 %v1369
    %1456 = vmatmul.bf16.gmra.mxu0 %v1149
    %v1457 = vpop.f32.mrf.mxu0
    %v1458 = vadd.f32 %v1445, %v1457
    %v1459 = vpop.f32.mrf.mxu0
    %1460 = vdwg.mxu0
    %v1461 = vxor.u32 %v1458, 2147483648
    %v1462 = vmul.f32 %v1461, 1.442695
    %v1463 = vpow.pop %v1462
    %v1464 = vadd.f32 %v1463, 1.0
    %v1465 = vrcp.pop %v1464
    %v1466 = vmul.f32 %v1464, %v1465
    %v1467 = vsub.f32 1.0, %v1466
    %v1468 = vmul.f32 %v1465, %v1467
    %v1469 = vadd.f32 %v1465, %v1468
    %vm1470 = vweird.f32 %v1464
    %vm1471 = vweird.f32 %v1465
    %vm1472 = vmor %vm1470, %vm1471
    %v1473 = vsel %vm1472, %v1465, %v1469
    %v1474 = vand.u32 2147483647, %v1464
    %vm1475 = vcmp.eq.f32.partialorder %v1474, 8.507059e+37
    %v1476 = vand.u32 %v1464, 2147483648
    %v1477 = vor.u32 1.1754944e-38, %v1476
    %v1478 = vsel %vm1475, %v1477, %v1473
    %v1479 = vmul.f32 1.0, %v1478
    %1481 = vset.pattern.permute.xlu0 0
    %1482 = vperm.xlu0 %1481, %v1479
    %v1483 = vpop.permute.xlu0 %1482
    %1485 = vst [vmem:[#allocation6] sm:$0xff] %v1483
    // Predicated region
    $region34: #{tpu_custom_call.1} parent=1 // pred_check
      _
    $region35: #{tpu_custom_call.1} parent=1 // pred_check_branch
      %1487 = sbr.rel (0) target = $region37
    $region36: #{tpu_custom_call.1} parent=1 // pred_region
      %1489 = vsyncadd [#allocation5], 0
      %s1491 = sshll.u32 [#allocation6], 4
      %s1492 = int_to_ptr.vmem [resolvable:$true] %s1491
      %s1493 = sshll.u32 %s7, 4
      %s1494 = int_to_ptr.hbm [resolvable:$true] %s1493
      %1496 = dma.vmem_to_hbm [thread:$0]  %s1492, 128, %s1494, [#allocation5]
    $region37: #{tpu_custom_call.1} parent=1 // pred_fallthru
      _
    // Predicated region
    $region38: #{tpu_custom_call.1} parent=1 // pred_check
      _
    $region39: #{tpu_custom_call.1} parent=1 // pred_check_branch
      %1498 = sbr.rel (0) target = $region41
    $region40: #{tpu_custom_call.1} parent=1 // pred_region
      %1500 = dma.done [#allocation5], 128
    $region41: #{tpu_custom_call.1} parent=1 // pred_fallthru
      _
    %1501 = vsyncpa [#allocation4], 1
    %1502 = vsyncpa [#allocation5], 1

</llo_original>
